<compile_context>
chip_gen: v5e
topology: v5e:2x2
jax: 0.10.0
libtpu: 0.0.40
codegen_flags: <defaults>
</compile_context>

<pallas_src>
import jax
import jax.numpy as jnp
from jax.experimental import pallas as pl
from jax.experimental.pallas import tpu as pltpu


def _round_up(x, m):
    return ((x + m - 1) // m) * m


def _tpu_generation():
    """Best-effort TPU generation detection (5 / 6 / 7). Defaults to 6."""
    try:
        kind = jax.devices()[0].device_kind.lower()
    except Exception:
        return 6
    if "v5" in kind:
        return 5
    if "v7" in kind or "7x" in kind:
        return 7
    if "v6" in kind:
        return 6
    return 6


# --------------------------------------------------------------------------
# Kernels
# --------------------------------------------------------------------------
def _mlp_fused_kernel(x_ref, w1_ref, b1_ref, w2_ref, b2_ref, o_ref):
    # Fast path: whole D reduction in one block.  Grid = (batch_tiles,).
    # x_ref:  [TB, Dp] bf16    w1_ref: [Dp, Hp] bf16 (resident)
    # b1_ref: [1, Hp]  f32     w2_ref: [Hp, Np] bf16 (resident)
    # b2_ref: [1, Np]  f32     o_ref:  [TB, Np] f32
    h = jnp.maximum(
        jnp.dot(x_ref[...], w1_ref[...], preferred_element_type=jnp.float32)
        + b1_ref[...], 0.0)
    logits = jnp.dot(h.astype(jnp.bfloat16), w2_ref[...],
                     preferred_element_type=jnp.float32) + b2_ref[...]
    o_ref[...] = logits.astype(o_ref.dtype)


def _mlp_tiled_k_kernel(x_ref, w1_ref, b1_ref, w2_ref, b2_ref, o_ref, acc_ref):
    # Fallback: D reduction tiled.  Grid = (batch_tiles, k_tiles); k is last.
    # acc_ref: [TB, Hp] f32 scratch, resident across the k axis.
    k = pl.program_id(1)

    @pl.when(k == 0)
    def _():
        acc_ref[...] = jnp.zeros_like(acc_ref)

    acc_ref[...] += jnp.dot(x_ref[...], w1_ref[...],
                            preferred_element_type=jnp.float32)

    @pl.when(k == pl.num_programs(1) - 1)
    def _():
        h = jnp.maximum(acc_ref[...] + b1_ref[...], 0.0)
        logits = jnp.dot(h.astype(jnp.bfloat16), w2_ref[...],
                         preferred_element_type=jnp.float32) + b2_ref[...]
        o_ref[...] = logits.astype(o_ref.dtype)


# --------------------------------------------------------------------------
# Parameter preparation (call ONCE at model init, not per forward)
# --------------------------------------------------------------------------
def prepare_params(w1, b1, w2, b2):
    """Pad + cast weights once; returns a dict consumed by base_model_forward."""
    D, H = int(w1.shape[0]), int(w1.shape[1])
    N = int(w2.shape[1])
    Dp = _round_up(D, 128)
    Hp = _round_up(H, 128)     # lane-dense hidden dim
    Np = _round_up(N, 128)     # lane-dense output dim (unmasked vst)

    w1_p = jnp.pad(w1.astype(jnp.bfloat16), ((0, Dp - D), (0, Hp - H)))
    b1_p = jnp.pad(jnp.reshape(b1, (1, -1)).astype(jnp.float32),
                   ((0, 0), (0, Hp - H)))
    w2_p = jnp.pad(w2.astype(jnp.bfloat16), ((0, Hp - H), (0, Np - N)))
    b2_p = jnp.pad(jnp.reshape(b2, (1, -1)).astype(jnp.float32),
                   ((0, 0), (0, Np - N)))
    return {
        "w1": w1_p, "b1": b1_p, "w2": w2_p, "b2": b2_p,
        "D": D, "H": H, "N": N, "Dp": Dp, "Hp": Hp, "Np": Np,
    }


# --------------------------------------------------------------------------
# Forward
# --------------------------------------------------------------------------
def base_model_forward(x_nchw, params):
    """Flatten NCHW input and run the fused MLP Pallas kernel."""
    B = int(x_nchw.shape[0])
    D, N = params["D"], params["N"]
    Dp, Hp, Np = params["Dp"], params["Hp"], params["Np"]
    x = jnp.reshape(x_nchw, (B, -1))
    assert x.shape[1] == D, "flattened input dim mismatch with w1"

    gen = _tpu_generation()

    # ---- batch tile -------------------------------------------------------
    if B <= 128:
        TB = max(_round_up(B, 16), 16)     # bf16 sublane packing = 16 rows
        B_pad = TB
    else:
        TB = 256 if gen >= 6 else 128      # 256-wide MXU on v6e/v7x
        B_pad = _round_up(B, TB)
    nb = B_pad // TB

    # ---- VMEM budget ------------------------------------------------------
    if gen >= 7:
        vmem_limit = 48 * 1024 * 1024      # 64 MiB physical on v7x
    else:
        vmem_limit = 96 * 1024 * 1024      # v5e/v6e: 128 MiB physical
    budget = int(vmem_limit * 0.75)

    # Activation pad (fuses well; padded rows/cols contribute zero and the
    # real logits are sliced back out at the end).
    x_p = jnp.pad(x.astype(jnp.bfloat16), ((0, B_pad - B), (0, Dp - D)))

    w1_p, b1_p = params["w1"], params["b1"]
    w2_p, b2_p = params["w2"], params["b2"]

    # Conservative double-buffered working-set estimate for the fused path.
    fused_bytes = (2 * (TB * Dp * 2          # x tile (bf16, dbl-buffered)
                        + Dp * Hp * 2        # w1 (resident, count 2x anyway)
                        + Hp * 4 + Np * 4    # biases
                        + Hp * Np * 2        # w2
                        + TB * Np * 4)       # output
                   + TB * Hp * 4)            # h intermediate

    cost = pl.CostEstimate(
        flops=2 * B_pad * Dp * Hp + 2 * B_pad * Hp * Np,
        transcendentals=0,
        bytes_accessed=(B_pad * Dp * 2 + Dp * Hp * 2 + Hp * Np * 2
                        + Hp * 4 + Np * 4 + B_pad * Np * 4),
    )

    if fused_bytes <= budget:
        # ---- fast path: no k axis, no scratch, w1 DMA'd exactly once ------
        out_p = pl.pallas_call(
            _mlp_fused_kernel,
            out_shape=jax.ShapeDtypeStruct((B_pad, Np), jnp.float32),
            grid_spec=pltpu.PrefetchScalarGridSpec(
                num_scalar_prefetch=0,
                grid=(nb,),
                in_specs=[
                    pl.BlockSpec((TB, Dp), lambda i: (i, 0)),   # x tile
                    pl.BlockSpec((Dp, Hp), lambda i: (0, 0)),   # w1 resident
                    pl.BlockSpec((1, Hp), lambda i: (0, 0)),    # b1 resident
                    pl.BlockSpec((Hp, Np), lambda i: (0, 0)),   # w2 resident
                    pl.BlockSpec((1, Np), lambda i: (0, 0)),    # b2 resident
                ],
                out_specs=pl.BlockSpec((TB, Np), lambda i: (i, 0)),
            ),
            compiler_params=pltpu.CompilerParams(
                dimension_semantics=("parallel",),
                vmem_limit_bytes=vmem_limit,
            ),
            cost_estimate=cost,
        )(x_p, w1_p, b1_p, w2_p, b2_p)
    else:
        # ---- fallback: tiled K with f32 VMEM accumulator -------------------
        # Largest TK (multiple of 128, dividing Dp) whose working set fits.
        m = Dp // 128
        TK = 128
        for d in range(m, 0, -1):
            if m % d != 0:
                continue
            cand = d * 128
            tiled_bytes = (2 * (TB * cand * 2       # x tile
                                + cand * Hp * 2     # w1 tile
                                + Hp * 4 + Np * 4
                                + Hp * Np * 2
                                + TB * Np * 4)
                           + TB * Hp * 4)           # acc scratch
            if tiled_bytes <= budget:
                TK = cand
                break
        nk = Dp // TK

        out_p = pl.pallas_call(
            _mlp_tiled_k_kernel,
            out_shape=jax.ShapeDtypeStruct((B_pad, Np), jnp.float32),
            grid_spec=pltpu.PrefetchScalarGridSpec(
                num_scalar_prefetch=0,
                grid=(nb, nk),
                in_specs=[
                    pl.BlockSpec((TB, TK), lambda i, k: (i, k)),   # x tile
                    pl.BlockSpec((TK, Hp), lambda i, k: (k, 0)),   # w1 tile
                    pl.BlockSpec((1, Hp), lambda i, k: (0, 0)),    # b1
                    pl.BlockSpec((Hp, Np), lambda i, k: (0, 0)),   # w2
                    pl.BlockSpec((1, Np), lambda i, k: (0, 0)),    # b2
                ],
                out_specs=pl.BlockSpec((TB, Np), lambda i, k: (i, 0)),
                scratch_shapes=[pltpu.VMEM((TB, Hp), jnp.float32)],
            ),
            compiler_params=pltpu.CompilerParams(
                dimension_semantics=("parallel", "arbitrary"),
                vmem_limit_bytes=vmem_limit,
            ),
            cost_estimate=cost,
        )(x_p, w1_p, b1_p, w2_p, b2_p)

    return out_p[:B, :N]


if __name__ == "__main__":
    # Small shapes consistent with a continual-learning image classifier:
    #   batch=2, channels=4, spatial=16x16  -> D = 1024
    #   hidden=32, tasks=5, classes_per_task=2 -> num_classes=10
    B, C, Hs, Ws = 2, 4, 16, 16
    D = C * Hs * Ws
    hidden = 32
    num_classes = 10

    key = jax.random.PRNGKey(0)
    kx, kw1, kb1, kw2, kb2 = jax.random.split(key, 5)

    x = jax.random.normal(kx, (B, C, Hs, Ws), dtype=jnp.float32)
    # Deterministic parameter init (Kaiming-like scaling).
    w1 = jax.random.normal(kw1, (D, hidden), dtype=jnp.float32) * (2.0 / D) ** 0.5
    b1 = jax.random.normal(kb1, (1, hidden), dtype=jnp.float32) * 0.01
    w2 = jax.random.normal(kw2, (hidden, num_classes), dtype=jnp.float32) * (2.0 / hidden) ** 0.5
    b2 = jax.random.normal(kb2, (1, num_classes), dtype=jnp.float32) * 0.01

    # Pad/cast weights ONCE (model init), then run the forward.
    params = prepare_params(w1, b1, w2, b2)
    logits = base_model_forward(x, params)
    jax.block_until_ready(logits)

    # Reference in plain JAX using the same bf16-operand / f32-accumulate recipe.
    x_flat = x.reshape(B, D)
    ref_h = jnp.maximum(
        jnp.dot(x_flat.astype(jnp.bfloat16), w1.astype(jnp.bfloat16),
                preferred_element_type=jnp.float32) + b1, 0.0)
    ref = jnp.dot(ref_h.astype(jnp.bfloat16), w2.astype(jnp.bfloat16),
                  preferred_element_type=jnp.float32) + b2

    assert logits.shape == (B, num_classes)
    assert jnp.allclose(logits, ref, atol=5e-3, rtol=5e-3), \
        float(jnp.max(jnp.abs(logits - ref)))

    print("KERNEL_OK")
</pallas_src>

<mosaic_0001>
module attributes {stable_mosaic.version = 11 : i64} {
  func.func @_mlp_fused_kernel(%arg0: i32, %arg1: memref<16x1024xbf16, #tpu.memory_space<vmem>>, %arg2: memref<1024x128xbf16, #tpu.memory_space<vmem>>, %arg3: memref<1x128xf32, #tpu.memory_space<vmem>>, %arg4: memref<128x128xbf16, #tpu.memory_space<vmem>>, %arg5: memref<1x128xf32, #tpu.memory_space<vmem>>, %arg6: memref<16x128xf32, #tpu.memory_space<vmem>>) attributes {dimension_semantics = [#tpu.dimension_semantics<parallel>], iteration_bounds = array<i64: 1>, scalar_prefetch = 0 : i64, scratch_operands = 0 : i64, tpu.core_type = #tpu.core_type<tc>, window_params = [{transform_indices = @transform_0, window_bounds = array<i64: 16, 1024>}, {pipeline_mode = #tpu.pipeline_mode<synchronous>, transform_indices = @transform_1, window_bounds = array<i64: 1024, 128>}, {pipeline_mode = #tpu.pipeline_mode<synchronous>, transform_indices = @transform_2, window_bounds = array<i64: 1, 128>}, {pipeline_mode = #tpu.pipeline_mode<synchronous>, transform_indices = @transform_3, window_bounds = array<i64: 128, 128>}, {pipeline_mode = #tpu.pipeline_mode<synchronous>, transform_indices = @transform_4, window_bounds = array<i64: 1, 128>}, {transform_indices = @transform_5, window_bounds = array<i64: 16, 128>}]} {
    %c0 = arith.constant 0 : index
    %c0_0 = arith.constant 0 : index
    %0 = vector.load %arg1[%c0, %c0_0] : memref<16x1024xbf16, #tpu.memory_space<vmem>>, vector<16x1024xbf16>
    %c0_1 = arith.constant 0 : index
    %c0_2 = arith.constant 0 : index
    %1 = vector.load %arg2[%c0_1, %c0_2] : memref<1024x128xbf16, #tpu.memory_space<vmem>>, vector<1024x128xbf16>
    %cst = arith.constant dense<0.000000e+00> : vector<16x128xf32>
    %2 = tpu.matmul %0, %1, %cst {dimension_numbers = #tpu.dot_dimension_numbers<[1], [0], [0], [1], [0, 0, 1, 1], [], []>} : vector<16x1024xbf16>, vector<1024x128xbf16>, vector<16x128xf32> -> vector<16x128xf32>
    %c0_3 = arith.constant 0 : index
    %c0_4 = arith.constant 0 : index
    %3 = vector.load %arg3[%c0_3, %c0_4] : memref<1x128xf32, #tpu.memory_space<vmem>>, vector<1x128xf32>
    %4 = vector.broadcast %3 : vector<1x128xf32> to vector<16x128xf32>
    %5 = arith.addf %2, %4 : vector<16x128xf32>
    %cst_5 = arith.constant 0.000000e+00 : f32
    %6 = vector.broadcast %cst_5 : f32 to vector<16x128xf32>
    %7 = arith.maximumf %5, %6 : vector<16x128xf32>
    %8 = arith.truncf %7 : vector<16x128xf32> to vector<16x128xbf16>
    %c0_6 = arith.constant 0 : index
    %c0_7 = arith.constant 0 : index
    %9 = vector.load %arg4[%c0_6, %c0_7] : memref<128x128xbf16, #tpu.memory_space<vmem>>, vector<128x128xbf16>
    %cst_8 = arith.constant dense<0.000000e+00> : vector<16x128xf32>
    %10 = tpu.matmul %8, %9, %cst_8 {dimension_numbers = #tpu.dot_dimension_numbers<[1], [0], [0], [1], [0, 0, 1, 1], [], []>} : vector<16x128xbf16>, vector<128x128xbf16>, vector<16x128xf32> -> vector<16x128xf32>
    %c0_9 = arith.constant 0 : index
    %c0_10 = arith.constant 0 : index
    %11 = vector.load %arg5[%c0_9, %c0_10] : memref<1x128xf32, #tpu.memory_space<vmem>>, vector<1x128xf32>
    %12 = vector.broadcast %11 : vector<1x128xf32> to vector<16x128xf32>
    %13 = arith.addf %10, %12 : vector<16x128xf32>
    %c0_11 = arith.constant 0 : index
    %c0_12 = arith.constant 0 : index
    %14 = vector.load %arg6[%c0_11, %c0_12] : memref<16x128xf32, #tpu.memory_space<vmem>>, vector<16x128xf32>
    tpu.vector_store %arg6[%c0_11, %c0_12], %13 {strides = array<i32>} : memref<16x128xf32, #tpu.memory_space<vmem>>, vector<16x128xf32>,
    return
  }
  func.func @transform_0(%arg0: i32) -> (i32, i32) {
    %c0_i32 = arith.constant 0 : i32
    %c0_i32_0 = arith.constant 0 : i32
    return %arg0, %c0_i32 : i32, i32
  }
  func.func @transform_1(%arg0: i32) -> (i32, i32) {
    %c0_i32 = arith.constant 0 : i32
    %c0_i32_0 = arith.constant 0 : i32
    %c0_i32_1 = arith.constant 0 : i32
    return %c0_i32, %c0_i32_0 : i32, i32
  }
  func.func @transform_2(%arg0: i32) -> (i32, i32) {
    %c0_i32 = arith.constant 0 : i32
    %c0_i32_0 = arith.constant 0 : i32
    %c0_i32_1 = arith.constant 0 : i32
    return %c0_i32, %c0_i32_0 : i32, i32
  }
  func.func @transform_3(%arg0: i32) -> (i32, i32) {
    %c0_i32 = arith.constant 0 : i32
    %c0_i32_0 = arith.constant 0 : i32
    %c0_i32_1 = arith.constant 0 : i32
    return %c0_i32, %c0_i32_0 : i32, i32
  }
  func.func @transform_4(%arg0: i32) -> (i32, i32) {
    %c0_i32 = arith.constant 0 : i32
    %c0_i32_0 = arith.constant 0 : i32
    %c0_i32_1 = arith.constant 0 : i32
    return %c0_i32, %c0_i32_0 : i32, i32
  }
  func.func @transform_5(%arg0: i32) -> (i32, i32) {
    %c0_i32 = arith.constant 0 : i32
    %c0_i32_0 = arith.constant 0 : i32
    return %arg0, %c0_i32 : i32, i32
  }
}

</mosaic_0001>

<llo_original>
// kernel: tpu_custom_call.1
$region0: #{tpu_custom_call.1}
  #allocation0 [shape = 'u32[]', space=smem, size = 0x4, offset = 0x4, fixed_abs, tag = 'smem constant byte address 0x4 - core index']
  #allocation1 [shape = 'u32[72,128]{1,0:T(1,128)}', space=vmem, size = 0x9000, scoped, tag = 'internal scratch']
  %s0 = inlined_call_operand.hbm [shape: bf16[16,1024], index: 0, kind: input, shape index: {}]
  %s1 = inlined_call_operand.hbm [shape: bf16[1024,128], index: 1, kind: input, shape index: {}]
  %s2 = inlined_call_operand.vmem [shape: f32[1,128], index: 2, kind: input, shape index: {}]
  %s3 = inlined_call_operand.hbm [shape: bf16[128,128], index: 3, kind: input, shape index: {}]
  %s4 = inlined_call_operand.vmem [shape: f32[1,128], index: 4, kind: input, shape index: {}]
  %s5 = inlined_call_operand.hbm [shape: f32[16,128], index: 5, kind: output, shape index: {}]
  %s6 = sld [smem:[#allocation0]]
  $region42: #{tpu_custom_call.1} parent=0
    _
  %s8 = ssub.s32 1, %s6
  %s9 = scalar_select 0, %s8, %s6
  $region1: #{tpu_custom_call.1} parent=0
    #allocation2 [shape = 'u8[32768]{0}', space=vmem, size = 0x8000, scoped, tag = 'input window, operand 0, single buffered']
    #allocation3 [shape = 's32[1]{0}', space=sflag, size = 0x4, scoped, tag = 'scoped memory for tpu_custom_call.1']
    #allocation4 [shape = 's32[1]{0}', space=sflag, size = 0x4, scoped, tag = 'scoped memory for tpu_custom_call.1']
    #allocation5 [shape = 'u8[262144]{0}', space=vmem, size = 0x40000, scoped, tag = 'input window, operand 1, single buffered']
    #allocation6 [shape = 's32[1]{0}', space=sflag, size = 0x4, scoped, tag = 'scoped memory for tpu_custom_call.1']
    #allocation7 [shape = 'u8[32768]{0}', space=vmem, size = 0x8000, scoped, tag = 'input window, operand 3, single buffered']
    #allocation8 [shape = 'u8[8192]{0}', space=vmem, size = 0x2000, scoped, tag = 'output window, operand 0, single buffered']
    %10 = vsyncpa [#allocation3], 0
    %11 = vsyncpa [#allocation6], 0
    %12 = vsyncpa [#allocation4], 0
    // Predicated region
    $region2: #{tpu_custom_call.1} parent=1 // pred_check
      _
    $region3: #{tpu_custom_call.1} parent=1 // pred_check_branch
      %14 = sbr.rel (0) target = $region5
    $region4: #{tpu_custom_call.1} parent=1 // pred_region
      %16 = vsyncadd [#allocation3], 0
      %s17 = sshll.u32 %s0, 4
      %s18 = int_to_ptr.hbm [resolvable:$true] %s17
      %s19 = sshll.u32 [#allocation2], 4
      %s20 = int_to_ptr.vmem [resolvable:$true] %s19
      %25 = dma.hbm_to_vmem [thread:$0]  %s18, 1024, %s20, [#allocation3], 512, 512, 32
    $region5: #{tpu_custom_call.1} parent=1 // pred_fallthru
      _
    // Predicated region
    $region6: #{tpu_custom_call.1} parent=1 // pred_check
      _
    $region7: #{tpu_custom_call.1} parent=1 // pred_check_branch
      %27 = sbr.rel (0) target = $region9
    $region8: #{tpu_custom_call.1} parent=1 // pred_region
      %29 = vsyncadd [#allocation6], 0
      %s30 = sshll.u32 %s1, 4
      %s31 = int_to_ptr.hbm [resolvable:$true] %s30
      %s32 = sshll.u32 [#allocation5], 4
      %s33 = int_to_ptr.vmem [resolvable:$true] %s32
      %38 = dma.hbm_to_vmem [thread:$0]  %s31, 8192, %s33, [#allocation6], 64, 64, 4
    $region9: #{tpu_custom_call.1} parent=1 // pred_fallthru
      _
    // Predicated region
    $region10: #{tpu_custom_call.1} parent=1 // pred_check
      _
    $region11: #{tpu_custom_call.1} parent=1 // pred_check_branch
      %40 = sbr.rel (0) target = $region13
    $region12: #{tpu_custom_call.1} parent=1 // pred_region
      _
    $region13: #{tpu_custom_call.1} parent=1 // pred_fallthru
      _
    // Predicated region
    $region14: #{tpu_custom_call.1} parent=1 // pred_check
      _
    $region15: #{tpu_custom_call.1} parent=1 // pred_check_branch
      %42 = sbr.rel (0) target = $region17
    $region16: #{tpu_custom_call.1} parent=1 // pred_region
      %44 = vsyncadd [#allocation6], 0
      %s45 = sshll.u32 %s3, 4
      %s46 = int_to_ptr.hbm [resolvable:$true] %s45
      %s47 = sshll.u32 [#allocation7], 4
      %s48 = int_to_ptr.vmem [resolvable:$true] %s47
      %53 = dma.hbm_to_vmem [thread:$0]  %s46, 1024, %s48, [#allocation6], 64, 64, 4
    $region17: #{tpu_custom_call.1} parent=1 // pred_fallthru
      _
    // Predicated region
    $region18: #{tpu_custom_call.1} parent=1 // pred_check
      _
    $region19: #{tpu_custom_call.1} parent=1 // pred_check_branch
      %55 = sbr.rel (0) target = $region21
    $region20: #{tpu_custom_call.1} parent=1 // pred_region
      _
    $region21: #{tpu_custom_call.1} parent=1 // pred_fallthru
      _
    // Predicated region
    $region22: #{tpu_custom_call.1} parent=1 // pred_check
      _
    $region23: #{tpu_custom_call.1} parent=1 // pred_check_branch
      %57 = sbr.rel (0) target = $region25
    $region24: #{tpu_custom_call.1} parent=1 // pred_region
      %59 = dma.done [#allocation3], 1024
    $region25: #{tpu_custom_call.1} parent=1 // pred_fallthru
      _
    // Predicated region
    $region26: #{tpu_custom_call.1} parent=1 // pred_check
      _
    $region27: #{tpu_custom_call.1} parent=1 // pred_check_branch
      %61 = sbr.rel (0) target = $region29
    $region28: #{tpu_custom_call.1} parent=1 // pred_region
      %63 = dma.done [#allocation6], 8192
    $region29: #{tpu_custom_call.1} parent=1 // pred_fallthru
      _
    // Predicated region
    $region30: #{tpu_custom_call.1} parent=1 // pred_check
      _
    $region31: #{tpu_custom_call.1} parent=1 // pred_check_branch
      %65 = sbr.rel (0) target = $region33
    $region32: #{tpu_custom_call.1} parent=1 // pred_region
      %67 = dma.done [#allocation6], 1024
    $region33: #{tpu_custom_call.1} parent=1 // pred_fallthru
      _
    %v68 = vld [vmem:[#allocation2] sm:$0xff]
    %v69 = vld [vmem:[#allocation2 + $0x8] sm:$0xff]
    %v70 = vld [vmem:[#allocation2 + $0x10] sm:$0xff]
    %v71 = vld [vmem:[#allocation2 + $0x18] sm:$0xff]
    %v72 = vld [vmem:[#allocation2 + $0x20] sm:$0xff]
    %v73 = vld [vmem:[#allocation2 + $0x28] sm:$0xff]
    %v74 = vld [vmem:[#allocation2 + $0x30] sm:$0xff]
    %v75 = vld [vmem:[#allocation2 + $0x38] sm:$0xff]
    %v76 = vld [vmem:[#allocation5] sm:$0xf]
    %v77 = vld [vmem:[#allocation5 + $0x4] sm:$0xf]
    %v78 = vld [vmem:[#allocation5 + $0x8] sm:$0xf]
    %v79 = vld [vmem:[#allocation5 + $0xc] sm:$0xf]
    %v80 = vld [vmem:[#allocation5 + $0x10] sm:$0xf]
    %v81 = vld [vmem:[#allocation5 + $0x14] sm:$0xf]
    %v82 = vld [vmem:[#allocation5 + $0x18] sm:$0xf]
    %v83 = vld [vmem:[#allocation5 + $0x1c] sm:$0xf]
    %v84 = vld [vmem:[#allocation5 + $0x20] sm:$0xf]
    %v85 = vld [vmem:[#allocation5 + $0x24] sm:$0xf]
    %v86 = vld [vmem:[#allocation5 + $0x28] sm:$0xf]
    %v87 = vld [vmem:[#allocation5 + $0x2c] sm:$0xf]
    %v88 = vld [vmem:[#allocation5 + $0x30] sm:$0xf]
    %v89 = vld [vmem:[#allocation5 + $0x34] sm:$0xf]
    %v90 = vld [vmem:[#allocation5 + $0x38] sm:$0xf]
    %v91 = vld [vmem:[#allocation5 + $0x3c] sm:$0xf]
    %v92 = vld [vmem:[#allocation5 + $0x40] sm:$0xf]
    %v93 = vld [vmem:[#allocation5 + $0x44] sm:$0xf]
    %v94 = vld [vmem:[#allocation5 + $0x48] sm:$0xf]
    %v95 = vld [vmem:[#allocation5 + $0x4c] sm:$0xf]
    %v96 = vld [vmem:[#allocation5 + $0x50] sm:$0xf]
    %v97 = vld [vmem:[#allocation5 + $0x54] sm:$0xf]
    %v98 = vld [vmem:[#allocation5 + $0x58] sm:$0xf]
    %v99 = vld [vmem:[#allocation5 + $0x5c] sm:$0xf]
    %v100 = vld [vmem:[#allocation5 + $0x60] sm:$0xf]
    %v101 = vld [vmem:[#allocation5 + $0x64] sm:$0xf]
    %v102 = vld [vmem:[#allocation5 + $0x68] sm:$0xf]
    %v103 = vld [vmem:[#allocation5 + $0x6c] sm:$0xf]
    %v104 = vld [vmem:[#allocation5 + $0x70] sm:$0xf]
    %v105 = vld [vmem:[#allocation5 + $0x74] sm:$0xf]
    %v106 = vld [vmem:[#allocation5 + $0x78] sm:$0xf]
    %v107 = vld [vmem:[#allocation5 + $0x7c] sm:$0xf]
    %v108 = vld [vmem:[#allocation5 + $0x80] sm:$0xf]
    %v109 = vld [vmem:[#allocation5 + $0x84] sm:$0xf]
    %v110 = vld [vmem:[#allocation5 + $0x88] sm:$0xf]
    %v111 = vld [vmem:[#allocation5 + $0x8c] sm:$0xf]
    %v112 = vld [vmem:[#allocation5 + $0x90] sm:$0xf]
    %v113 = vld [vmem:[#allocation5 + $0x94] sm:$0xf]
    %v114 = vld [vmem:[#allocation5 + $0x98] sm:$0xf]
    %v115 = vld [vmem:[#allocation5 + $0x9c] sm:$0xf]
    %v116 = vld [vmem:[#allocation5 + $0xa0] sm:$0xf]
    %v117 = vld [vmem:[#allocation5 + $0xa4] sm:$0xf]
    %v118 = vld [vmem:[#allocation5 + $0xa8] sm:$0xf]
    %v119 = vld [vmem:[#allocation5 + $0xac] sm:$0xf]
    %v120 = vld [vmem:[#allocation5 + $0xb0] sm:$0xf]
    %v121 = vld [vmem:[#allocation5 + $0xb4] sm:$0xf]
    %v122 = vld [vmem:[#allocation5 + $0xb8] sm:$0xf]
    %v123 = vld [vmem:[#allocation5 + $0xbc] sm:$0xf]
    %v124 = vld [vmem:[#allocation5 + $0xc0] sm:$0xf]
    %v125 = vld [vmem:[#allocation5 + $0xc4] sm:$0xf]
    %v126 = vld [vmem:[#allocation5 + $0xc8] sm:$0xf]
    %v127 = vld [vmem:[#allocation5 + $0xcc] sm:$0xf]
    %v128 = vld [vmem:[#allocation5 + $0xd0] sm:$0xf]
    %v129 = vld [vmem:[#allocation5 + $0xd4] sm:$0xf]
    %v130 = vld [vmem:[#allocation5 + $0xd8] sm:$0xf]
    %v131 = vld [vmem:[#allocation5 + $0xdc] sm:$0xf]
    %v132 = vld [vmem:[#allocation5 + $0xe0] sm:$0xf]
    %v133 = vld [vmem:[#allocation5 + $0xe4] sm:$0xf]
    %v134 = vld [vmem:[#allocation5 + $0xe8] sm:$0xf]
    %v135 = vld [vmem:[#allocation5 + $0xec] sm:$0xf]
    %v136 = vld [vmem:[#allocation5 + $0xf0] sm:$0xf]
    %v137 = vld [vmem:[#allocation5 + $0xf4] sm:$0xf]
    %v138 = vld [vmem:[#allocation5 + $0xf8] sm:$0xf]
    %v139 = vld [vmem:[#allocation5 + $0xfc] sm:$0xf]
    %v140 = vld [vmem:[#allocation5 + $0x100] sm:$0xf]
    %v141 = vld [vmem:[#allocation5 + $0x104] sm:$0xf]
    %v142 = vld [vmem:[#allocation5 + $0x108] sm:$0xf]
    %v143 = vld [vmem:[#allocation5 + $0x10c] sm:$0xf]
    %v144 = vld [vmem:[#allocation5 + $0x110] sm:$0xf]
    %v145 = vld [vmem:[#allocation5 + $0x114] sm:$0xf]
    %v146 = vld [vmem:[#allocation5 + $0x118] sm:$0xf]
    %v147 = vld [vmem:[#allocation5 + $0x11c] sm:$0xf]
    %v148 = vld [vmem:[#allocation5 + $0x120] sm:$0xf]
    %v149 = vld [vmem:[#allocation5 + $0x124] sm:$0xf]
    %v150 = vld [vmem:[#allocation5 + $0x128] sm:$0xf]
    %v151 = vld [vmem:[#allocation5 + $0x12c] sm:$0xf]
    %v152 = vld [vmem:[#allocation5 + $0x130] sm:$0xf]
    %v153 = vld [vmem:[#allocation5 + $0x134] sm:$0xf]
    %v154 = vld [vmem:[#allocation5 + $0x138] sm:$0xf]
    %v155 = vld [vmem:[#allocation5 + $0x13c] sm:$0xf]
    %v156 = vld [vmem:[#allocation5 + $0x140] sm:$0xf]
    %v157 = vld [vmem:[#allocation5 + $0x144] sm:$0xf]
    %v158 = vld [vmem:[#allocation5 + $0x148] sm:$0xf]
    %v159 = vld [vmem:[#allocation5 + $0x14c] sm:$0xf]
    %v160 = vld [vmem:[#allocation5 + $0x150] sm:$0xf]
    %v161 = vld [vmem:[#allocation5 + $0x154] sm:$0xf]
    %v162 = vld [vmem:[#allocation5 + $0x158] sm:$0xf]
    %v163 = vld [vmem:[#allocation5 + $0x15c] sm:$0xf]
    %v164 = vld [vmem:[#allocation5 + $0x160] sm:$0xf]
    %v165 = vld [vmem:[#allocation5 + $0x164] sm:$0xf]
    %v166 = vld [vmem:[#allocation5 + $0x168] sm:$0xf]
    %v167 = vld [vmem:[#allocation5 + $0x16c] sm:$0xf]
    %v168 = vld [vmem:[#allocation5 + $0x170] sm:$0xf]
    %v169 = vld [vmem:[#allocation5 + $0x174] sm:$0xf]
    %v170 = vld [vmem:[#allocation5 + $0x178] sm:$0xf]
    %v171 = vld [vmem:[#allocation5 + $0x17c] sm:$0xf]
    %v172 = vld [vmem:[#allocation5 + $0x180] sm:$0xf]
    %v173 = vld [vmem:[#allocation5 + $0x184] sm:$0xf]
    %v174 = vld [vmem:[#allocation5 + $0x188] sm:$0xf]
    %v175 = vld [vmem:[#allocation5 + $0x18c] sm:$0xf]
    %v176 = vld [vmem:[#allocation5 + $0x190] sm:$0xf]
    %v177 = vld [vmem:[#allocation5 + $0x194] sm:$0xf]
    %v178 = vld [vmem:[#allocation5 + $0x198] sm:$0xf]
    %v179 = vld [vmem:[#allocation5 + $0x19c] sm:$0xf]
    %v180 = vld [vmem:[#allocation5 + $0x1a0] sm:$0xf]
    %v181 = vld [vmem:[#allocation5 + $0x1a4] sm:$0xf]
    %v182 = vld [vmem:[#allocation5 + $0x1a8] sm:$0xf]
    %v183 = vld [vmem:[#allocation5 + $0x1ac] sm:$0xf]
    %v184 = vld [vmem:[#allocation5 + $0x1b0] sm:$0xf]
    %v185 = vld [vmem:[#allocation5 + $0x1b4] sm:$0xf]
    %v186 = vld [vmem:[#allocation5 + $0x1b8] sm:$0xf]
    %v187 = vld [vmem:[#allocation5 + $0x1bc] sm:$0xf]
    %v188 = vld [vmem:[#allocation5 + $0x1c0] sm:$0xf]
    %v189 = vld [vmem:[#allocation5 + $0x1c4] sm:$0xf]
    %v190 = vld [vmem:[#allocation5 + $0x1c8] sm:$0xf]
    %v191 = vld [vmem:[#allocation5 + $0x1cc] sm:$0xf]
    %v192 = vld [vmem:[#allocation5 + $0x1d0] sm:$0xf]
    %v193 = vld [vmem:[#allocation5 + $0x1d4] sm:$0xf]
    %v194 = vld [vmem:[#allocation5 + $0x1d8] sm:$0xf]
    %v195 = vld [vmem:[#allocation5 + $0x1dc] sm:$0xf]
    %v196 = vld [vmem:[#allocation5 + $0x1e0] sm:$0xf]
    %v197 = vld [vmem:[#allocation5 + $0x1e4] sm:$0xf]
    %v198 = vld [vmem:[#allocation5 + $0x1e8] sm:$0xf]
    %v199 = vld [vmem:[#allocation5 + $0x1ec] sm:$0xf]
    %v200 = vld [vmem:[#allocation5 + $0x1f0] sm:$0xf]
    %v201 = vld [vmem:[#allocation5 + $0x1f4] sm:$0xf]
    %v202 = vld [vmem:[#allocation5 + $0x1f8] sm:$0xf]
    %v203 = vld [vmem:[#allocation5 + $0x1fc] sm:$0xf]
    %v204 = vld [vmem:[%s2] sm:$0x1]
    %v206 = vperm.slane %v204, 0
    %v216 = vunpack.c.l.b16 %v68
    %v217 = vunpack.c.h.b16 %v68
    %v218 = vunpack.c.l.b16 %v69
    %v219 = vunpack.c.h.b16 %v69
    %v220 = vunpack.c.l.b16 %v70
    %v221 = vunpack.c.h.b16 %v70
    %v222 = vunpack.c.l.b16 %v71
    %v223 = vunpack.c.h.b16 %v71
    %v224 = vunpack.c.l.b16 %v72
    %v225 = vunpack.c.h.b16 %v72
    %v226 = vunpack.c.l.b16 %v73
    %v227 = vunpack.c.h.b16 %v73
    %v228 = vunpack.c.l.b16 %v74
    %v229 = vunpack.c.h.b16 %v74
    %v230 = vunpack.c.l.b16 %v75
    %v231 = vunpack.c.h.b16 %v75
    %v232 = vpack.c.b16 %v224, %v216
    %v233 = vpack.c.b16 %v225, %v217
    %v234 = vpack.c.b16 %v226, %v218
    %v235 = vpack.c.b16 %v227, %v219
    %v236 = vpack.c.b16 %v228, %v220
    %v237 = vpack.c.b16 %v229, %v221
    %v238 = vpack.c.b16 %v230, %v222
    %v239 = vpack.c.b16 %v231, %v223
    %v376 = vunpack.c.l.b16 %v76
    %v377 = vunpack.c.l.b16 %v77
    %v378 = vunpack.c.l.b16 %v78
    %v379 = vunpack.c.l.b16 %v79
    %v380 = vunpack.c.l.b16 %v80
    %v381 = vunpack.c.l.b16 %v81
    %v382 = vunpack.c.l.b16 %v82
    %v383 = vunpack.c.l.b16 %v83
    %v384 = vunpack.c.l.b16 %v84
    %v385 = vunpack.c.l.b16 %v85
    %v386 = vunpack.c.l.b16 %v86
    %v387 = vunpack.c.l.b16 %v87
    %v388 = vunpack.c.l.b16 %v88
    %v389 = vunpack.c.l.b16 %v89
    %v390 = vunpack.c.l.b16 %v90
    %v391 = vunpack.c.l.b16 %v91
    %v392 = vunpack.c.l.b16 %v92
    %v393 = vunpack.c.l.b16 %v93
    %v394 = vunpack.c.l.b16 %v94
    %v395 = vunpack.c.l.b16 %v95
    %v396 = vunpack.c.l.b16 %v96
    %v397 = vunpack.c.l.b16 %v97
    %v398 = vunpack.c.l.b16 %v98
    %v399 = vunpack.c.l.b16 %v99
    %v400 = vunpack.c.l.b16 %v100
    %v401 = vunpack.c.l.b16 %v101
    %v402 = vunpack.c.l.b16 %v102
    %v403 = vunpack.c.l.b16 %v103
    %v404 = vunpack.c.l.b16 %v104
    %v405 = vunpack.c.l.b16 %v105
    %v406 = vunpack.c.l.b16 %v106
    %v407 = vunpack.c.l.b16 %v107
    %v408 = vunpack.c.l.b16 %v108
    %v409 = vunpack.c.l.b16 %v109
    %v410 = vunpack.c.l.b16 %v110
    %v411 = vunpack.c.l.b16 %v111
    %v412 = vunpack.c.l.b16 %v112
    %v413 = vunpack.c.l.b16 %v113
    %v414 = vunpack.c.l.b16 %v114
    %v415 = vunpack.c.l.b16 %v115
    %v416 = vunpack.c.l.b16 %v116
    %v417 = vunpack.c.l.b16 %v117
    %v418 = vunpack.c.l.b16 %v118
    %v419 = vunpack.c.l.b16 %v119
    %v420 = vunpack.c.l.b16 %v120
    %v421 = vunpack.c.l.b16 %v121
    %v422 = vunpack.c.l.b16 %v122
    %v423 = vunpack.c.l.b16 %v123
    %v424 = vunpack.c.l.b16 %v124
    %v425 = vunpack.c.l.b16 %v125
    %v426 = vunpack.c.l.b16 %v126
    %v427 = vunpack.c.l.b16 %v127
    %v428 = vunpack.c.l.b16 %v128
    %v429 = vunpack.c.l.b16 %v129
    %v430 = vunpack.c.l.b16 %v130
    %v431 = vunpack.c.l.b16 %v131
    %v432 = vunpack.c.l.b16 %v132
    %v433 = vunpack.c.l.b16 %v133
    %v434 = vunpack.c.l.b16 %v134
    %v435 = vunpack.c.l.b16 %v135
    %v436 = vunpack.c.l.b16 %v136
    %v437 = vunpack.c.l.b16 %v137
    %v438 = vunpack.c.l.b16 %v138
    %v439 = vunpack.c.l.b16 %v139
    %v440 = vunpack.c.l.b16 %v140
    %v441 = vunpack.c.l.b16 %v141
    %v442 = vunpack.c.l.b16 %v142
    %v443 = vunpack.c.l.b16 %v143
    %v444 = vunpack.c.l.b16 %v144
    %v445 = vunpack.c.l.b16 %v145
    %v446 = vunpack.c.l.b16 %v146
    %v447 = vunpack.c.l.b16 %v147
    %v448 = vunpack.c.l.b16 %v148
    %v449 = vunpack.c.l.b16 %v149
    %v450 = vunpack.c.l.b16 %v150
    %v451 = vunpack.c.l.b16 %v151
    %v452 = vunpack.c.l.b16 %v152
    %v453 = vunpack.c.l.b16 %v153
    %v454 = vunpack.c.l.b16 %v154
    %v455 = vunpack.c.l.b16 %v155
    %v456 = vunpack.c.l.b16 %v156
    %v457 = vunpack.c.l.b16 %v157
    %v458 = vunpack.c.l.b16 %v158
    %v459 = vunpack.c.l.b16 %v159
    %v460 = vunpack.c.l.b16 %v160
    %v461 = vunpack.c.l.b16 %v161
    %v462 = vunpack.c.l.b16 %v162
    %v463 = vunpack.c.l.b16 %v163
    %v464 = vunpack.c.l.b16 %v164
    %v465 = vunpack.c.l.b16 %v165
    %v466 = vunpack.c.l.b16 %v166
    %v467 = vunpack.c.l.b16 %v167
    %v468 = vunpack.c.l.b16 %v168
    %v469 = vunpack.c.l.b16 %v169
    %v470 = vunpack.c.l.b16 %v170
    %v471 = vunpack.c.l.b16 %v171
    %v472 = vunpack.c.l.b16 %v172
    %v473 = vunpack.c.l.b16 %v173
    %v474 = vunpack.c.l.b16 %v174
    %v475 = vunpack.c.l.b16 %v175
    %v476 = vunpack.c.l.b16 %v176
    %v477 = vunpack.c.l.b16 %v177
    %v478 = vunpack.c.l.b16 %v178
    %v479 = vunpack.c.l.b16 %v179
    %v480 = vunpack.c.l.b16 %v180
    %v481 = vunpack.c.l.b16 %v181
    %v482 = vunpack.c.l.b16 %v182
    %v483 = vunpack.c.l.b16 %v183
    %v484 = vunpack.c.l.b16 %v184
    %v485 = vunpack.c.l.b16 %v185
    %v486 = vunpack.c.l.b16 %v186
    %v487 = vunpack.c.l.b16 %v187
    %v488 = vunpack.c.l.b16 %v188
    %v489 = vunpack.c.l.b16 %v189
    %v490 = vunpack.c.l.b16 %v190
    %v491 = vunpack.c.l.b16 %v191
    %v492 = vunpack.c.l.b16 %v192
    %v493 = vunpack.c.l.b16 %v193
    %v494 = vunpack.c.l.b16 %v194
    %v495 = vunpack.c.l.b16 %v195
    %v496 = vunpack.c.l.b16 %v196
    %v497 = vunpack.c.l.b16 %v197
    %v498 = vunpack.c.l.b16 %v198
    %v499 = vunpack.c.l.b16 %v199
    %v500 = vunpack.c.l.b16 %v200
    %v501 = vunpack.c.l.b16 %v201
    %v502 = vunpack.c.l.b16 %v202
    %v503 = vunpack.c.l.b16 %v203
    %v504 = vpack.c.b16 %v377, %v376
    %v505 = vpack.c.b16 %v379, %v378
    %v506 = vpack.c.b16 %v381, %v380
    %v507 = vpack.c.b16 %v383, %v382
    %v508 = vpack.c.b16 %v385, %v384
    %v509 = vpack.c.b16 %v387, %v386
    %v510 = vpack.c.b16 %v389, %v388
    %v511 = vpack.c.b16 %v391, %v390
    %v512 = vpack.c.b16 %v393, %v392
    %v513 = vpack.c.b16 %v395, %v394
    %v514 = vpack.c.b16 %v397, %v396
    %v515 = vpack.c.b16 %v399, %v398
    %v516 = vpack.c.b16 %v401, %v400
    %v517 = vpack.c.b16 %v403, %v402
    %v518 = vpack.c.b16 %v405, %v404
    %v519 = vpack.c.b16 %v407, %v406
    %v520 = vpack.c.b16 %v409, %v408
    %v521 = vpack.c.b16 %v411, %v410
    %v522 = vpack.c.b16 %v413, %v412
    %v523 = vpack.c.b16 %v415, %v414
    %v524 = vpack.c.b16 %v417, %v416
    %v525 = vpack.c.b16 %v419, %v418
    %v526 = vpack.c.b16 %v421, %v420
    %v527 = vpack.c.b16 %v423, %v422
    %v528 = vpack.c.b16 %v425, %v424
    %v529 = vpack.c.b16 %v427, %v426
    %v530 = vpack.c.b16 %v429, %v428
    %v531 = vpack.c.b16 %v431, %v430
    %v532 = vpack.c.b16 %v433, %v432
    %v533 = vpack.c.b16 %v435, %v434
    %v534 = vpack.c.b16 %v437, %v436
    %v535 = vpack.c.b16 %v439, %v438
    %v536 = vpack.c.b16 %v441, %v440
    %v537 = vpack.c.b16 %v443, %v442
    %v538 = vpack.c.b16 %v445, %v444
    %v539 = vpack.c.b16 %v447, %v446
    %v540 = vpack.c.b16 %v449, %v448
    %v541 = vpack.c.b16 %v451, %v450
    %v542 = vpack.c.b16 %v453, %v452
    %v543 = vpack.c.b16 %v455, %v454
    %v544 = vpack.c.b16 %v457, %v456
    %v545 = vpack.c.b16 %v459, %v458
    %v546 = vpack.c.b16 %v461, %v460
    %v547 = vpack.c.b16 %v463, %v462
    %v548 = vpack.c.b16 %v465, %v464
    %v549 = vpack.c.b16 %v467, %v466
    %v550 = vpack.c.b16 %v469, %v468
    %v551 = vpack.c.b16 %v471, %v470
    %v552 = vpack.c.b16 %v473, %v472
    %v553 = vpack.c.b16 %v475, %v474
    %v554 = vpack.c.b16 %v477, %v476
    %v555 = vpack.c.b16 %v479, %v478
    %v556 = vpack.c.b16 %v481, %v480
    %v557 = vpack.c.b16 %v483, %v482
    %v558 = vpack.c.b16 %v485, %v484
    %v559 = vpack.c.b16 %v487, %v486
    %v560 = vpack.c.b16 %v489, %v488
    %v561 = vpack.c.b16 %v491, %v490
    %v562 = vpack.c.b16 %v493, %v492
    %v563 = vpack.c.b16 %v495, %v494
    %v564 = vpack.c.b16 %v497, %v496
    %v565 = vpack.c.b16 %v499, %v498
    %v566 = vpack.c.b16 %v501, %v500
    %v567 = vpack.c.b16 %v503, %v502
    %632 = vmatpush.bf16.msra.mxu0 %v511
    %633 = vmatpush.bf16.msra.mxu0 %v510
    %634 = vmatpush.bf16.msra.mxu0 %v509
    %635 = vmatpush.bf16.msra.mxu0 %v508
    %636 = vmatpush.bf16.msra.mxu0 %v507
    %637 = vmatpush.bf16.msra.mxu0 %v506
    %638 = vmatpush.bf16.msra.mxu0 %v505
    %639 = vmatpush.bf16.msra.mxu0 %v504
    %640 = vmatmul.bf16.gmra.mxu0 %v232
    %v641 = vpop.f32.mrf.mxu0
    %v642 = vadd.f32 %v206, %v641
    %v643 = vpop.f32.mrf.mxu0
    %v644 = vadd.f32 %v206, %v643
    %645 = vdwg.mxu0
    %646 = vmatpush.bf16.msra.mxu0 %v519
    %647 = vmatpush.bf16.msra.mxu0 %v518
    %648 = vmatpush.bf16.msra.mxu0 %v517
    %649 = vmatpush.bf16.msra.mxu0 %v516
    %650 = vmatpush.bf16.msra.mxu0 %v515
    %651 = vmatpush.bf16.msra.mxu0 %v514
    %652 = vmatpush.bf16.msra.mxu0 %v513
    %653 = vmatpush.bf16.msra.mxu0 %v512
    %654 = vmatmul.bf16.gmra.mxu0 %v233
    %v655 = vpop.f32.mrf.mxu0
    %v656 = vadd.f32 %v642, %v655
    %v657 = vpop.f32.mrf.mxu0
    %v658 = vadd.f32 %v644, %v657
    %659 = vdwg.mxu0
    %660 = vmatpush.bf16.msra.mxu0 %v527
    %661 = vmatpush.bf16.msra.mxu0 %v526
    %662 = vmatpush.bf16.msra.mxu0 %v525
    %663 = vmatpush.bf16.msra.mxu0 %v524
    %664 = vmatpush.bf16.msra.mxu0 %v523
    %665 = vmatpush.bf16.msra.mxu0 %v522
    %666 = vmatpush.bf16.msra.mxu0 %v521
    %667 = vmatpush.bf16.msra.mxu0 %v520
    %668 = vmatmul.bf16.gmra.mxu0 %v234
    %v669 = vpop.f32.mrf.mxu0
    %v670 = vadd.f32 %v656, %v669
    %v671 = vpop.f32.mrf.mxu0
    %v672 = vadd.f32 %v658, %v671
    %673 = vdwg.mxu0
    %674 = vmatpush.bf16.msra.mxu0 %v535
    %675 = vmatpush.bf16.msra.mxu0 %v534
    %676 = vmatpush.bf16.msra.mxu0 %v533
    %677 = vmatpush.bf16.msra.mxu0 %v532
    %678 = vmatpush.bf16.msra.mxu0 %v531
    %679 = vmatpush.bf16.msra.mxu0 %v530
    %680 = vmatpush.bf16.msra.mxu0 %v529
    %681 = vmatpush.bf16.msra.mxu0 %v528
    %682 = vmatmul.bf16.gmra.mxu0 %v235
    %v683 = vpop.f32.mrf.mxu0
    %v684 = vadd.f32 %v670, %v683
    %v685 = vpop.f32.mrf.mxu0
    %v686 = vadd.f32 %v672, %v685
    %687 = vdwg.mxu0
    %688 = vmatpush.bf16.msra.mxu0 %v543
    %689 = vmatpush.bf16.msra.mxu0 %v542
    %690 = vmatpush.bf16.msra.mxu0 %v541
    %691 = vmatpush.bf16.msra.mxu0 %v540
    %692 = vmatpush.bf16.msra.mxu0 %v539
    %693 = vmatpush.bf16.msra.mxu0 %v538
    %694 = vmatpush.bf16.msra.mxu0 %v537
    %695 = vmatpush.bf16.msra.mxu0 %v536
    %696 = vmatmul.bf16.gmra.mxu0 %v236
    %v697 = vpop.f32.mrf.mxu0
    %v698 = vadd.f32 %v684, %v697
    %v699 = vpop.f32.mrf.mxu0
    %v700 = vadd.f32 %v686, %v699
    %701 = vdwg.mxu0
    %702 = vmatpush.bf16.msra.mxu0 %v551
    %703 = vmatpush.bf16.msra.mxu0 %v550
    %704 = vmatpush.bf16.msra.mxu0 %v549
    %705 = vmatpush.bf16.msra.mxu0 %v548
    %706 = vmatpush.bf16.msra.mxu0 %v547
    %707 = vmatpush.bf16.msra.mxu0 %v546
    %708 = vmatpush.bf16.msra.mxu0 %v545
    %709 = vmatpush.bf16.msra.mxu0 %v544
    %710 = vmatmul.bf16.gmra.mxu0 %v237
    %v711 = vpop.f32.mrf.mxu0
    %v712 = vadd.f32 %v698, %v711
    %v713 = vpop.f32.mrf.mxu0
    %v714 = vadd.f32 %v700, %v713
    %715 = vdwg.mxu0
    %716 = vmatpush.bf16.msra.mxu0 %v559
    %717 = vmatpush.bf16.msra.mxu0 %v558
    %718 = vmatpush.bf16.msra.mxu0 %v557
    %719 = vmatpush.bf16.msra.mxu0 %v556
    %720 = vmatpush.bf16.msra.mxu0 %v555
    %721 = vmatpush.bf16.msra.mxu0 %v554
    %722 = vmatpush.bf16.msra.mxu0 %v553
    %723 = vmatpush.bf16.msra.mxu0 %v552
    %724 = vmatmul.bf16.gmra.mxu0 %v238
    %v725 = vpop.f32.mrf.mxu0
    %v726 = vadd.f32 %v712, %v725
    %v727 = vpop.f32.mrf.mxu0
    %v728 = vadd.f32 %v714, %v727
    %729 = vdwg.mxu0
    %730 = vmatpush.bf16.msra.mxu0 %v567
    %731 = vmatpush.bf16.msra.mxu0 %v566
    %732 = vmatpush.bf16.msra.mxu0 %v565
    %733 = vmatpush.bf16.msra.mxu0 %v564
    %734 = vmatpush.bf16.msra.mxu0 %v563
    %735 = vmatpush.bf16.msra.mxu0 %v562
    %736 = vmatpush.bf16.msra.mxu0 %v561
    %737 = vmatpush.bf16.msra.mxu0 %v560
    %738 = vmatmul.bf16.gmra.mxu0 %v239
    %v739 = vpop.f32.mrf.mxu0
    %v740 = vadd.f32 %v726, %v739
    %v741 = vpop.f32.mrf.mxu0
    %v742 = vadd.f32 %v728, %v741
    %743 = vdwg.mxu0
    %v744 = vmax.f32 %v740, 0.0
    %v745 = vmax.f32 %v742, 0.0
    %v746 = vpack.c.bf16 %v745, %v744
    %v747 = vld [vmem:[#allocation7] sm:$0xf]
    %v748 = vld [vmem:[#allocation7 + $0x4] sm:$0xf]
    %v749 = vld [vmem:[#allocation7 + $0x8] sm:$0xf]
    %v750 = vld [vmem:[#allocation7 + $0xc] sm:$0xf]
    %v751 = vld [vmem:[#allocation7 + $0x10] sm:$0xf]
    %v752 = vld [vmem:[#allocation7 + $0x14] sm:$0xf]
    %v753 = vld [vmem:[#allocation7 + $0x18] sm:$0xf]
    %v754 = vld [vmem:[#allocation7 + $0x1c] sm:$0xf]
    %v755 = vld [vmem:[#allocation7 + $0x20] sm:$0xf]
    %v756 = vld [vmem:[#allocation7 + $0x24] sm:$0xf]
    %v757 = vld [vmem:[#allocation7 + $0x28] sm:$0xf]
    %v758 = vld [vmem:[#allocation7 + $0x2c] sm:$0xf]
    %v759 = vld [vmem:[#allocation7 + $0x30] sm:$0xf]
    %v760 = vld [vmem:[#allocation7 + $0x34] sm:$0xf]
    %v761 = vld [vmem:[#allocation7 + $0x38] sm:$0xf]
    %v762 = vld [vmem:[#allocation7 + $0x3c] sm:$0xf]
    %v763 = vld [vmem:[%s4] sm:$0x1]
    %v765 = vperm.slane %v763, 0
    %v783 = vunpack.c.l.b16 %v747
    %v784 = vunpack.c.l.b16 %v748
    %v785 = vunpack.c.l.b16 %v749
    %v786 = vunpack.c.l.b16 %v750
    %v787 = vunpack.c.l.b16 %v751
    %v788 = vunpack.c.l.b16 %v752
    %v789 = vunpack.c.l.b16 %v753
    %v790 = vunpack.c.l.b16 %v754
    %v791 = vunpack.c.l.b16 %v755
    %v792 = vunpack.c.l.b16 %v756
    %v793 = vunpack.c.l.b16 %v757
    %v794 = vunpack.c.l.b16 %v758
    %v795 = vunpack.c.l.b16 %v759
    %v796 = vunpack.c.l.b16 %v760
    %v797 = vunpack.c.l.b16 %v761
    %v798 = vunpack.c.l.b16 %v762
    %v799 = vpack.c.b16 %v784, %v783
    %v800 = vpack.c.b16 %v786, %v785
    %v801 = vpack.c.b16 %v788, %v787
    %v802 = vpack.c.b16 %v790, %v789
    %v803 = vpack.c.b16 %v792, %v791
    %v804 = vpack.c.b16 %v794, %v793
    %v805 = vpack.c.b16 %v796, %v795
    %v806 = vpack.c.b16 %v798, %v797
    %815 = vmatpush.bf16.msra.mxu0 %v806
    %816 = vmatpush.bf16.msra.mxu0 %v805
    %817 = vmatpush.bf16.msra.mxu0 %v804
    %818 = vmatpush.bf16.msra.mxu0 %v803
    %819 = vmatpush.bf16.msra.mxu0 %v802
    %820 = vmatpush.bf16.msra.mxu0 %v801
    %821 = vmatpush.bf16.msra.mxu0 %v800
    %822 = vmatpush.bf16.msra.mxu0 %v799
    %823 = vmatmul.bf16.gmra.mxu0 %v746
    %v824 = vpop.f32.mrf.mxu0
    %v825 = vadd.f32 %v765, %v824
    %v826 = vpop.f32.mrf.mxu0
    %v827 = vadd.f32 %v765, %v826
    %828 = vdwg.mxu0
    %829 = vst [vmem:[#allocation8] sm:$0xff] %v825
    %830 = vst [vmem:[#allocation8 + $0x8] sm:$0xff] %v827
    // Predicated region
    $region34: #{tpu_custom_call.1} parent=1 // pred_check
      _
    $region35: #{tpu_custom_call.1} parent=1 // pred_check_branch
      %832 = sbr.rel (0) target = $region37
    $region36: #{tpu_custom_call.1} parent=1 // pred_region
      %834 = vsyncadd [#allocation4], 0
      %s835 = sshll.u32 [#allocation8], 4
      %s836 = int_to_ptr.vmem [resolvable:$true] %s835
      %s837 = sshll.u32 %s5, 4
      %s838 = int_to_ptr.hbm [resolvable:$true] %s837
      %843 = dma.vmem_to_hbm [thread:$0]  %s836, 256, %s838, [#allocation4], 128, 128, 8
    $region37: #{tpu_custom_call.1} parent=1 // pred_fallthru
      _
    // Predicated region
    $region38: #{tpu_custom_call.1} parent=1 // pred_check
      _
    $region39: #{tpu_custom_call.1} parent=1 // pred_check_branch
      %845 = sbr.rel (0) target = $region41
    $region40: #{tpu_custom_call.1} parent=1 // pred_region
      %847 = dma.done [#allocation4], 256
    $region41: #{tpu_custom_call.1} parent=1 // pred_fallthru
      _
    %848 = vsyncpa [#allocation3], 1
    %849 = vsyncpa [#allocation6], 1
    %850 = vsyncpa [#allocation4], 1

</llo_original>
